<compile_context>
chip_gen: v7x
topology: tpu7x:2x2x1
jax: 0.10.0
libtpu: 0.0.40
codegen_flags: <defaults>
</compile_context>

<pallas_src>
import functools

import numpy as np
import jax
import jax.numpy as jnp
from jax.experimental import pallas as pl
from jax.experimental.pallas import tpu as pltpu


# --------------------------------------------------------------------------
# Host-side soft_sort (ascending, l2 regularization) — faithful to torchsort /
# google-research/fast-soft-sort forward semantics.
# --------------------------------------------------------------------------
def _isotonic_l2(y):
    """PAV: argmin_{v1 >= v2 >= ... >= vn} 0.5 * ||v - y||^2."""
    n = y.shape[0]
    target = np.arange(n)
    c = np.ones(n, dtype=np.float64)
    sums = y.copy()
    sol = y.copy()

    i = 0
    while i < n:
        k = target[i] + 1
        if k == n:
            break
        if sol[i] > sol[k]:
            i = k
            continue
        sum_y = sums[i]
        sum_c = c[i]
        while True:
            prev_y = sol[k]
            sum_y += sums[k]
            sum_c += c[k]
            k = target[k] + 1
            if k == n or prev_y > sol[k]:
                sol[i] = sum_y / sum_c
                sums[i] = sum_y
                c[i] = sum_c
                target[i] = k - 1
                target[k - 1] = i
                if i > 0:
                    i = target[i - 1]
                break
    i = 0
    while i < n:
        k = target[i] + 1
        sol[i + 1:k] = sol[i]
        i = k
    return sol


def soft_sort(values, regularization_strength=1.0):
    """Ascending soft sort of a flat array (l2 regularization)."""
    values = np.asarray(values, dtype=np.float64).reshape(-1)
    n = values.shape[0]
    sign = -1.0  # ascending
    w = np.arange(n, 0, -1, dtype=np.float64) / float(regularization_strength)
    v = sign * values
    perm = np.argsort(v)[::-1]          # descending sort of v
    s = v[perm]
    sol = _isotonic_l2(w - s)
    return (sign * (w - sol)).astype(np.float32)


# --------------------------------------------------------------------------
# Pallas kernel: elementwise loss + weighting + chunked reduction
# --------------------------------------------------------------------------
_LANES = 128
_SUBLANES_PER_CHUNK = 1024   # 1024 x 128 f32 = 512 KiB per operand per block


def _elem_loss(x, t, kind):
    d = x - t
    if kind == "l1":
        return jnp.abs(d)
    if kind == "l2":
        return d * d
    if kind == "focal_l1":  # beta=0.2, gamma=1, sigmoid activation
        beta = 0.2
        ad = jnp.abs(d)
        return ad * (2.0 * jax.nn.sigmoid(beta * ad) - 1.0)
    if kind == "huber":     # beta=1.0
        beta = 1.0
        ad = jnp.abs(d)
        return jnp.where(ad < beta, 0.5 * ad * ad / beta, ad - 0.5 * beta)
    raise ValueError(f"unsupported loss_fn kind: {kind}")


def _distloss_kernel(x_ref, out_ref, acc_ref, *, loss_kind, loss_weight, scale):
    # x_ref : (5, CHUNK, 128) f32 VMEM block.
    #         rows = [sorted_inp, theoretical, inp, tar, weights] (zero-padded,
    #         padded lanes carry weight 0 so they contribute nothing).
    # out_ref: (3,) f32 SMEM -> [total, dist, plain] (already mean-scaled).
    # acc_ref: (2,) f32 SMEM scratch accumulator, persistent across the grid.
    i = pl.program_id(0)

    @pl.when(i == 0)
    def _init():
        acc_ref[0] = jnp.float32(0.0)
        acc_ref[1] = jnp.float32(0.0)

    w = x_ref[4]
    dist = _elem_loss(x_ref[0], x_ref[1], loss_kind) * w
    plain = _elem_loss(x_ref[2], x_ref[3], loss_kind) * w
    acc_ref[0] += jnp.sum(dist)
    acc_ref[1] += jnp.sum(plain)

    @pl.when(i == pl.num_programs(0) - 1)
    def _finalize():
        dist_s = acc_ref[0] * scale
        plain_s = acc_ref[1] * scale
        out_ref[0] = loss_weight * dist_s + plain_s
        out_ref[1] = dist_s
        out_ref[2] = plain_s


def _loss_sums(packed, loss_kind, loss_weight, scale, chunk_sublanes):
    n_ops, s_total, lanes = packed.shape
    assert s_total % chunk_sublanes == 0
    grid = (s_total // chunk_sublanes,)
    kernel = functools.partial(_distloss_kernel,
                               loss_kind=loss_kind,
                               loss_weight=float(loss_weight),
                               scale=float(scale))
    return pl.pallas_call(
        kernel,
        out_shape=jax.ShapeDtypeStruct((3,), jnp.float32),
        grid_spec=pltpu.PrefetchScalarGridSpec(
            num_scalar_prefetch=0,
            grid=grid,
            in_specs=[pl.BlockSpec((n_ops, chunk_sublanes, lanes),
                                   lambda i: (0, i, 0))],
            out_specs=pl.BlockSpec((3,), lambda i: (0,),
                                   memory_space=pltpu.MemorySpace.SMEM),
            scratch_shapes=[pltpu.SMEM((2,), jnp.float32)]),
        compiler_params=pltpu.CompilerParams(
            dimension_semantics=("arbitrary",)),
    )(packed)


# --------------------------------------------------------------------------
# DistLoss.forward
# --------------------------------------------------------------------------
_LOSS_ALIASES = {"l1": "l1", "L1": "l1", "mae": "l1", "MAE": "l1",
                 "l2": "l2", "L2": "l2", "mse": "l2", "MSE": "l2",
                 "focal_l1": "focal_l1", "huber": "huber"}


def dist_loss_forward(inp, tar, theoretical_labels, weights=None, *,
                      size_average=True, loss_fn="L1", loss_weight=1.0,
                      regularization_strength=0.1, require_loss_values=False):
    loss_kind = _LOSS_ALIASES[loss_fn]

    # One host fetch for everything: soft_sort needs `inp` on the host anyway
    # (the reference explicitly does inp.reshape(1, -1).cpu()); tar/theo/w are
    # tiny, so packing them host-side saves four device-side pad dispatches.
    inp_np = np.asarray(jax.device_get(inp), dtype=np.float32).reshape(-1)
    tar_np = np.asarray(jax.device_get(tar), dtype=np.float32).reshape(-1)
    theo_np = np.asarray(jax.device_get(theoretical_labels),
                         dtype=np.float32).reshape(-1)
    n = inp_np.size

    sorted_np = soft_sort(inp_np, regularization_strength=regularization_strength)

    if weights is None:
        w_np = np.ones((n,), np.float32)
    else:
        w_np = np.ascontiguousarray(np.broadcast_to(
            np.asarray(jax.device_get(weights), np.float32).reshape(-1), (n,)))

    # Sublane-dense packing: pad N to a multiple of 8*128, (optionally) to a
    # multiple of the chunk, and stack all five operands into one array.
    min_block = 8 * _LANES
    padded = ((n + min_block - 1) // min_block) * min_block
    s_total = padded // _LANES
    if s_total > _SUBLANES_PER_CHUNK:
        s_total = ((s_total + _SUBLANES_PER_CHUNK - 1)
                   // _SUBLANES_PER_CHUNK) * _SUBLANES_PER_CHUNK
    chunk = min(s_total, _SUBLANES_PER_CHUNK)

    packed = np.zeros((5, s_total, _LANES), dtype=np.float32)
    flat = packed.reshape(5, s_total * _LANES)
    flat[0, :n] = sorted_np
    flat[1, :n] = theo_np
    flat[2, :n] = inp_np
    flat[3, :n] = tar_np
    flat[4, :n] = w_np

    # Mean (like torch .mean(): divide by number of elements) folded into the
    # kernel as a compile-time scalar.
    scale = (1.0 / float(n)) if size_average else 1.0

    out = _loss_sums(packed, loss_kind, loss_weight, scale, chunk)

    if require_loss_values:
        return out[0], out[1], out[2]
    return out[0]


# --------------------------------------------------------------------------
if __name__ == "__main__":
    key = jax.random.PRNGKey(0)
    k1, k2, k3 = jax.random.split(key, 3)

    N = 256  # batch of age predictions, shape (N, 1) as in AgeDB-DIR
    inp = jax.random.normal(k1, (N, 1), jnp.float32) * 10.0 + 35.0
    tar = jax.random.uniform(k2, (N, 1), jnp.float32, minval=1.0, maxval=100.0)
    # theoretical labels from KDE are sorted ascending
    theo = jnp.sort(jax.random.uniform(k3, (N, 1), jnp.float32,
                                       minval=1.0, maxval=100.0), axis=0)

    total, dist, plain = dist_loss_forward(
        inp, tar, theo, size_average=True, loss_fn="L1",
        loss_weight=1.0, regularization_strength=0.1,
        require_loss_values=True)
    total = jax.block_until_ready(total)

    # plain numpy reference check (same soft_sort, L1, mean)
    sorted_ref = soft_sort(np.asarray(inp).reshape(-1), 0.1).reshape(-1, 1)
    dist_np = np.abs(sorted_ref - np.asarray(theo))
    plain_np = np.abs(np.asarray(inp) - np.asarray(tar))
    ref_total = (1.0 * dist_np + plain_np).mean()
    np.testing.assert_allclose(float(total), float(ref_total), rtol=2e-4, atol=2e-4)
    np.testing.assert_allclose(float(dist), float(dist_np.mean()), rtol=2e-4, atol=2e-4)
    np.testing.assert_allclose(float(plain), float(plain_np.mean()), rtol=2e-4, atol=2e-4)

    # scalar-only path
    loss_only = jax.block_until_ready(
        dist_loss_forward(inp, tar, theo, size_average=True, loss_fn="L1",
                          loss_weight=1.0, regularization_strength=0.1))
    np.testing.assert_allclose(float(loss_only), float(ref_total),
                               rtol=2e-4, atol=2e-4)

    print("KERNEL_OK")
</pallas_src>

<mosaic_0001>
module attributes {stable_mosaic.version = 11 : i64} {
  func.func @_distloss_kernel(%arg0: i32, %arg1: memref<5x8x128xf32, #tpu.memory_space<vmem>>, %arg2: memref<3xf32, #tpu.memory_space<smem>>, %arg3: memref<2xf32, #tpu.memory_space<smem>>) attributes {dimension_semantics = [#tpu.dimension_semantics<arbitrary>], iteration_bounds = array<i64: 1>, scalar_prefetch = 0 : i64, scratch_operands = 1 : i64, tpu.core_type = #tpu.core_type<tc>, window_params = [{transform_indices = @transform_0, window_bounds = array<i64: 5, 8, 128>}, {transform_indices = @transform_1, window_bounds = array<i64: 3>}]} {
    %c0_i32 = arith.constant 0 : i32
    %0 = arith.cmpi eq, %arg0, %c0_i32 : i32
    %1 = arith.extui %0 : i1 to i32
    %c0_i32_0 = arith.constant 0 : i32
    %2 = arith.cmpi ne, %1, %c0_i32_0 : i32
    scf.if %2 {
      %cst_18 = arith.constant 0.000000e+00 : f32
      %c0_19 = arith.constant 0 : index
      %36 = memref.load %arg3[%c0_19] : memref<2xf32, #tpu.memory_space<smem>>
      memref.store %cst_18, %arg3[%c0_19] : memref<2xf32, #tpu.memory_space<smem>>
      %cst_20 = arith.constant 0.000000e+00 : f32
      %c1_21 = arith.constant 1 : index
      %37 = memref.load %arg3[%c1_21] : memref<2xf32, #tpu.memory_space<smem>>
      memref.store %cst_20, %arg3[%c1_21] : memref<2xf32, #tpu.memory_space<smem>>
    } else {
    }
    %c4 = arith.constant 4 : index
    %c0 = arith.constant 0 : index
    %c0_1 = arith.constant 0 : index
    %3 = vector.load %arg1[%c4, %c0, %c0_1] : memref<5x8x128xf32, #tpu.memory_space<vmem>>, vector<1x8x128xf32>
    %4 = vector.shape_cast %3 : vector<1x8x128xf32> to vector<8x128xf32>
    %c0_2 = arith.constant 0 : index
    %c0_3 = arith.constant 0 : index
    %c0_4 = arith.constant 0 : index
    %5 = vector.load %arg1[%c0_2, %c0_3, %c0_4] : memref<5x8x128xf32, #tpu.memory_space<vmem>>, vector<1x8x128xf32>
    %6 = vector.shape_cast %5 : vector<1x8x128xf32> to vector<8x128xf32>
    %c1 = arith.constant 1 : index
    %c0_5 = arith.constant 0 : index
    %c0_6 = arith.constant 0 : index
    %7 = vector.load %arg1[%c1, %c0_5, %c0_6] : memref<5x8x128xf32, #tpu.memory_space<vmem>>, vector<1x8x128xf32>
    %8 = vector.shape_cast %7 : vector<1x8x128xf32> to vector<8x128xf32>
    %9 = arith.subf %6, %8 : vector<8x128xf32>
    %10 = math.absf %9 : vector<8x128xf32>
    %11 = arith.mulf %10, %4 : vector<8x128xf32>
    %c2 = arith.constant 2 : index
    %c0_7 = arith.constant 0 : index
    %c0_8 = arith.constant 0 : index
    %12 = vector.load %arg1[%c2, %c0_7, %c0_8] : memref<5x8x128xf32, #tpu.memory_space<vmem>>, vector<1x8x128xf32>
    %13 = vector.shape_cast %12 : vector<1x8x128xf32> to vector<8x128xf32>
    %c3 = arith.constant 3 : index
    %c0_9 = arith.constant 0 : index
    %c0_10 = arith.constant 0 : index
    %14 = vector.load %arg1[%c3, %c0_9, %c0_10] : memref<5x8x128xf32, #tpu.memory_space<vmem>>, vector<1x8x128xf32>
    %15 = vector.shape_cast %14 : vector<1x8x128xf32> to vector<8x128xf32>
    %16 = arith.subf %13, %15 : vector<8x128xf32>
    %17 = math.absf %16 : vector<8x128xf32>
    %18 = arith.mulf %17, %4 : vector<8x128xf32>
    %c0_11 = arith.constant 0 : index
    %19 = memref.load %arg3[%c0_11] : memref<2xf32, #tpu.memory_space<smem>>
    %20 = vector.shape_cast %11 : vector<8x128xf32> to vector<1x8x128xf32>
    %cst = arith.constant dense<0.000000e+00> : vector<1xf32>
    %21 = vector.multi_reduction <add>, %20, %cst [1, 2] : vector<1x8x128xf32> to vector<1xf32>
    %22 = vector.shape_cast %21 : vector<1xf32> to vector<1x1x1xf32>
    %23 = vector.extract %22[0, 0, 0] : f32 from vector<1x1x1xf32>
    %24 = arith.addf %19, %23 : f32
    %c0_12 = arith.constant 0 : index
    %25 = memref.load %arg3[%c0_12] : memref<2xf32, #tpu.memory_space<smem>>
    memref.store %24, %arg3[%c0_12] : memref<2xf32, #tpu.memory_space<smem>>
    %c1_13 = arith.constant 1 : index
    %26 = memref.load %arg3[%c1_13] : memref<2xf32, #tpu.memory_space<smem>>
    %27 = vector.shape_cast %18 : vector<8x128xf32> to vector<1x8x128xf32>
    %cst_14 = arith.constant dense<0.000000e+00> : vector<1xf32>
    %28 = vector.multi_reduction <add>, %27, %cst_14 [1, 2] : vector<1x8x128xf32> to vector<1xf32>
    %29 = vector.shape_cast %28 : vector<1xf32> to vector<1x1x1xf32>
    %30 = vector.extract %29[0, 0, 0] : f32 from vector<1x1x1xf32>
    %31 = arith.addf %26, %30 : f32
    %c1_15 = arith.constant 1 : index
    %32 = memref.load %arg3[%c1_15] : memref<2xf32, #tpu.memory_space<smem>>
    memref.store %31, %arg3[%c1_15] : memref<2xf32, #tpu.memory_space<smem>>
    %c0_i32_16 = arith.constant 0 : i32
    %33 = arith.cmpi eq, %arg0, %c0_i32_16 : i32
    %34 = arith.extui %33 : i1 to i32
    %c0_i32_17 = arith.constant 0 : i32
    %35 = arith.cmpi ne, %34, %c0_i32_17 : i32
    scf.if %35 {
      %c0_18 = arith.constant 0 : index
      %36 = memref.load %arg3[%c0_18] : memref<2xf32, #tpu.memory_space<smem>>
      %cst_19 = arith.constant 3.906250e-03 : f32
      %37 = arith.mulf %36, %cst_19 : f32
      %c1_20 = arith.constant 1 : index
      %38 = memref.load %arg3[%c1_20] : memref<2xf32, #tpu.memory_space<smem>>
      %cst_21 = arith.constant 3.906250e-03 : f32
      %39 = arith.mulf %38, %cst_21 : f32
      %cst_22 = arith.constant 1.000000e+00 : f32
      %40 = arith.mulf %cst_22, %37 : f32
      %41 = arith.addf %40, %39 : f32
      %c0_23 = arith.constant 0 : index
      %42 = memref.load %arg2[%c0_23] : memref<3xf32, #tpu.memory_space<smem>>
      memref.store %41, %arg2[%c0_23] : memref<3xf32, #tpu.memory_space<smem>>
      %c1_24 = arith.constant 1 : index
      %43 = memref.load %arg2[%c1_24] : memref<3xf32, #tpu.memory_space<smem>>
      memref.store %37, %arg2[%c1_24] : memref<3xf32, #tpu.memory_space<smem>>
      %c2_25 = arith.constant 2 : index
      %44 = memref.load %arg2[%c2_25] : memref<3xf32, #tpu.memory_space<smem>>
      memref.store %39, %arg2[%c2_25] : memref<3xf32, #tpu.memory_space<smem>>
    } else {
    }
    return
  }
  func.func @transform_0(%arg0: i32) -> (i32, i32, i32) {
    %c0_i32 = arith.constant 0 : i32
    %c0_i32_0 = arith.constant 0 : i32
    %c0_i32_1 = arith.constant 0 : i32
    return %c0_i32, %arg0, %c0_i32_0 : i32, i32, i32
  }
  func.func @transform_1(%arg0: i32) -> i32 {
    %c0_i32 = arith.constant 0 : i32
    %c0_i32_0 = arith.constant 0 : i32
    return %c0_i32 : i32
  }
}

</mosaic_0001>

<llo_original>
// kernel: tpu_custom_call.1
$region0: #{tpu_custom_call.1}
  #allocation0 [shape = 'u32[]', space=smem, size = 0x4, offset = 0x4, fixed_abs, tag = 'smem constant byte address 0x4 - core index']
  #allocation1 [shape = 'u32[144,128]{1,0:T(1,128)}', space=vmem, size = 0x12000, scoped, tag = 'internal scratch']
  #allocation2 [shape = 'f32[2]{0:T(128)}', space=smem, size = 0x200, scoped, tag = 'scratch operand']
  %s0 = inlined_call_operand.hbm [shape: f32[5,8,128], index: 0, kind: input, shape index: {}]
  %s1 = inlined_call_operand.hbm [shape: f32[3], index: 1, kind: output, shape index: {}]
  %s2 = sld [smem:[#allocation0]]
  $region26: #{tpu_custom_call.1} parent=0
    _
  %s4 = ssub.s32 1, %s2
  %s5 = scalar_select 0, %s4, %s2
  $region1: #{tpu_custom_call.1} parent=0
    #allocation3 [shape = 'u8[20480]{0}', space=vmem, size = 0x5000, scoped, tag = 'input window, operand 0, single buffered']
    #allocation4 [shape = 's32[1]{0}', space=sflag, size = 0x4, scoped, tag = 'scoped memory for tpu_custom_call.1']
    #allocation5 [shape = 's32[1]{0}', space=sflag, size = 0x4, scoped, tag = 'scoped memory for tpu_custom_call.1']
    #allocation6 [shape = 'u8[512]{0}', space=smem, size = 0x200, scoped, tag = 'output window, operand 0, single buffered']
    %6 = vsyncpa [#allocation4], 0
    %7 = vsyncpa [#allocation5], 0
    // Predicated region
    $region2: #{tpu_custom_call.1} parent=1 // pred_check
      _
    $region3: #{tpu_custom_call.1} parent=1 // pred_check_branch
      %9 = sbr.rel (0) target = $region5
    $region4: #{tpu_custom_call.1} parent=1 // pred_region
      %s11 = ssub.s32 640, 640
      %12 = vsyncadd [#allocation4], %s11
      %s13 = sshll.u32 [#allocation3], 4
      %s14 = int_to_ptr.vmem [resolvable:$true] %s13
      %19 = dma.hbm_to_vmem [thread:$0]  %s0, 640, %s14, [#allocation4], 128, 128, 8
    $region5: #{tpu_custom_call.1} parent=1 // pred_fallthru
      _
    // Predicated region
    $region6: #{tpu_custom_call.1} parent=1 // pred_check
      _
    $region7: #{tpu_custom_call.1} parent=1 // pred_check_branch
      %21 = sbr.rel (0) target = $region9
    $region8: #{tpu_custom_call.1} parent=1 // pred_region
      %22 = dma.done [#allocation4], 640
    $region9: #{tpu_custom_call.1} parent=1 // pred_fallthru
      _
    %p23 = scmp.eq.s32.totalorder 0, 0
    // Predicated region
    $region10: #{tpu_custom_call.1} parent=1 // pred_check
      %p24 = pneg %p23
    $region11: #{tpu_custom_call.1} parent=1 // pred_check_branch
      %26 = sbr.rel (%p24) target = $region13
    $region12: #{tpu_custom_call.1} parent=1 // pred_region
      %s27 = scalar_lea.smem [#allocation2], 0
      %28 = sst [smem:[%s27]] 0.0
      %s29 = scalar_lea.smem [#allocation2], 1
      %30 = sst [smem:[%s29]] 0.0
    $region13: #{tpu_custom_call.1} parent=1 // pred_fallthru
      _
    %s31 = scalar_lea.vmem [#allocation3], 32
    %v32 = vld [vmem:[%s31] sm:$0xff]
    %v33 = vld [vmem:[#allocation3] sm:$0xff]
    %s34 = scalar_lea.vmem [#allocation3], 8
    %v35 = vld [vmem:[%s34] sm:$0xff]
    %v36 = vsub.f32 %v33, %v35
    %v37 = vand.u32 2147483647, %v36
    %v38 = vmul.f32 %v37, %v32
    %s39 = scalar_lea.vmem [#allocation3], 16
    %v40 = vld [vmem:[%s39] sm:$0xff]
    %s41 = scalar_lea.vmem [#allocation3], 24
    %v42 = vld [vmem:[%s41] sm:$0xff]
    %v43 = vsub.f32 %v40, %v42
    %v44 = vand.u32 2147483647, %v43
    %v45 = vmul.f32 %v44, %v32
    %s46 = sld [smem:[#allocation2]]
    %47 = vadd.xlane.f32.xlu0 %v38
    %v48 = vpop.xlane.xlu0 %47
    %v49 = vrot.slane %v48, 4
    %v50 = vadd.f32 %v48, %v49
    %v51 = vrot.slane %v50, 2
    %v52 = vadd.f32 %v50, %v51
    %v53 = vrot.slane %v52, 1
    %v54 = vadd.f32 %v52, %v53
    %s55 = vtos %v54
    %s56 = sadd.f32 %s46, %s55
    %s57 = scalar_lea.smem [#allocation2], 0
    %58 = sst [smem:[%s57]] %s56
    %s59 = sld [smem:[#allocation2 + $0x1]]
    %60 = vadd.xlane.f32.xlu0 %v45
    %v61 = vpop.xlane.xlu0 %60
    %v62 = vrot.slane %v61, 4
    %v63 = vadd.f32 %v61, %v62
    %v64 = vrot.slane %v63, 2
    %v65 = vadd.f32 %v63, %v64
    %v66 = vrot.slane %v65, 1
    %v67 = vadd.f32 %v65, %v66
    %s68 = vtos %v67
    %s69 = sadd.f32 %s59, %s68
    %s70 = scalar_lea.smem [#allocation2], 1
    %71 = sst [smem:[%s70]] %s69
    // Predicated region
    $region14: #{tpu_custom_call.1} parent=1 // pred_check
      %p72 = pneg %p23
    $region15: #{tpu_custom_call.1} parent=1 // pred_check_branch
      %74 = sbr.rel (%p72) target = $region17
    $region16: #{tpu_custom_call.1} parent=1 // pred_region
      %s75 = sld [smem:[#allocation2]]
      %s76 = smul.f32 %s75, 0.00390625
      %s77 = sld [smem:[#allocation2 + $0x1]]
      %s78 = smul.f32 %s77, 0.00390625
      %s79 = sadd.f32 %s76, %s78
      %s80 = scalar_lea.smem [#allocation6], 0
      %81 = sst [smem:[%s80]] %s79
      %s82 = scalar_lea.smem [#allocation6], 1
      %83 = sst [smem:[%s82]] %s76
      %s84 = scalar_lea.smem [#allocation6], 2
      %85 = sst [smem:[%s84]] %s78
    $region17: #{tpu_custom_call.1} parent=1 // pred_fallthru
      _
    // Predicated region
    $region18: #{tpu_custom_call.1} parent=1 // pred_check
      _
    $region19: #{tpu_custom_call.1} parent=1 // pred_check_branch
      %87 = sbr.rel (0) target = $region21
    $region20: #{tpu_custom_call.1} parent=1 // pred_region
      %s89 = ssub.s32 16, 16
      %90 = vsyncadd [#allocation5], %s89
      %93 = dma.smem_to_hbm [#allocation6], 16, %s1, [#allocation5]
    $region21: #{tpu_custom_call.1} parent=1 // pred_fallthru
      _
    // Predicated region
    $region22: #{tpu_custom_call.1} parent=1 // pred_check
      _
    $region23: #{tpu_custom_call.1} parent=1 // pred_check_branch
      %95 = sbr.rel (0) target = $region25
    $region24: #{tpu_custom_call.1} parent=1 // pred_region
      %96 = dma.done [#allocation5], 16
    $region25: #{tpu_custom_call.1} parent=1 // pred_fallthru
      _
    %97 = sfence
    %98 = vsyncpa [#allocation4], 1
    %99 = vsyncpa [#allocation5], 1

</llo_original>
